<compile_context>
chip_gen: v7x
topology: tpu7x:2x2x1
jax: 0.10.0
libtpu: 0.0.40
codegen_flags: <defaults>
</compile_context>

<pallas_src>
import functools

import jax
import jax.numpy as jnp
from jax.experimental import pallas as pl
from jax.experimental.pallas import tpu as pltpu


def _round_up(x, m):
    return ((x + m - 1) // m) * m


def mlp_softmax_kernel(x_ref, w_ref, b_ref, o_ref):
    # fused (layer1 o layer2): bf16 MXU inputs, f32 accumulation, f32 bias add
    logits = jnp.dot(x_ref[...].astype(jnp.bfloat16), w_ref[...],
                     preferred_element_type=jnp.float32)
    logits = logits + b_ref[...]
    # softmax over dim=1 (class axis); output last dim == hidden2 exactly, so
    # there are no padded lanes and no masking is required.
    m = jnp.max(logits, axis=1, keepdims=True)
    e = jnp.exp(logits - m)
    denom = jnp.sum(e, axis=1, keepdims=True)
    o_ref[...] = (e / denom).astype(o_ref.dtype)


def fold_params(w1, b1, w2, b2):
    """layer2(layer1(x)) == x @ (W1 @ W2) + (b1 @ W2 + b2).

    No activation between the two nn.Linear layers, so fold once at init:
    the K*H1 contraction happens in f32 here, only the folded W is bf16."""
    w = (w1 @ w2).astype(jnp.bfloat16)        # (input_size, hidden2)
    b = (b1 @ w2 + b2).astype(jnp.float32)    # (1, hidden2)
    return w, b


def _choose_tb(batch, max_tb, min_steps):
    # balanced tiles: tail padding <= 7 rows, and at least `min_steps` grid
    # steps (when the batch allows) so the "parallel" axis can shard across
    # both TensorCores on v7x.
    n_steps = max(pl.cdiv(batch, max_tb), min(min_steps, pl.cdiv(batch, 8)))
    tb = _round_up(pl.cdiv(batch, n_steps), 8)
    return tb, pl.cdiv(batch, tb)


@functools.partial(jax.jit, static_argnames=("max_tb", "min_steps"))
def torch_model_forward(x, w, b, *, max_tb=1024, min_steps=2):
    """y_pred = softmax(x @ w + b, dim=1) with (w, b) from fold_params."""
    batch, input_size = x.shape
    hidden2 = w.shape[1]

    tb, n_steps = _choose_tb(batch, max_tb, min_steps)
    bp = tb * n_steps
    # only the batch (sublane) dim is ever padded; lane dims use full-array
    # blocks so no padded copies of x / W / b are materialized in HBM.
    xp = x if bp == batch else jnp.pad(x, ((0, bp - batch), (0, 0)))

    cost = pl.CostEstimate(
        flops=2 * bp * input_size * hidden2,
        transcendentals=bp * hidden2,
        bytes_accessed=(bp * input_size * 4 + w.size * 2 + b.size * 4
                        + bp * hidden2 * 4),
    )

    out = pl.pallas_call(
        mlp_softmax_kernel,
        out_shape=jax.ShapeDtypeStruct((bp, hidden2), jnp.float32),
        grid=(n_steps,),
        in_specs=[
            # x tile, pipelined over the batch; last dim == full array dim
            pl.BlockSpec((tb, input_size), lambda i: (i, 0)),
            # folded weight + bias stay resident across grid steps
            pl.BlockSpec((input_size, hidden2), lambda i: (0, 0)),
            pl.BlockSpec((1, hidden2), lambda i: (0, 0)),
        ],
        out_specs=pl.BlockSpec((tb, hidden2), lambda i: (i, 0)),
        compiler_params=pltpu.CompilerParams(
            dimension_semantics=("parallel",)),
        cost_estimate=cost,
    )(xp, w, b)

    return out[:batch]


def init_params(key, input_size, hidden1, hidden2):
    """Deterministic init mimicking nn.Linear's U(-1/sqrt(fan_in), ...).
    Weights kept as (in, out) so the math is x @ W + b."""
    k1, k2, k3, k4 = jax.random.split(key, 4)
    bound1 = 1.0 / jnp.sqrt(input_size)
    bound2 = 1.0 / jnp.sqrt(hidden1)
    w1 = jax.random.uniform(k1, (input_size, hidden1), jnp.float32, -bound1, bound1)
    b1 = jax.random.uniform(k2, (1, hidden1), jnp.float32, -bound1, bound1)
    w2 = jax.random.uniform(k3, (hidden1, hidden2), jnp.float32, -bound2, bound2)
    b2 = jax.random.uniform(k4, (1, hidden2), jnp.float32, -bound2, bound2)
    return w1, b1, w2, b2


if __name__ == "__main__":
    # small shapes consistent with the module: batch=8, input=32, h1=64, h2=16
    batch, input_size, hidden1, hidden2 = 8, 32, 64, 16

    key = jax.random.PRNGKey(0)
    kx, kp = jax.random.split(key)
    x = jax.random.normal(kx, (batch, input_size), jnp.float32)
    w1, b1, w2, b2 = init_params(kp, input_size, hidden1, hidden2)

    # fold weights once at init (not per forward call)
    w, b = fold_params(w1, b1, w2, b2)

    y_pred = jax.block_until_ready(torch_model_forward(x, w, b))

    # reference mirroring the kernel's bf16-matmul / f32-accumulate precision
    ref_bf16 = jax.nn.softmax(
        jnp.dot(x.astype(jnp.bfloat16), w, preferred_element_type=jnp.float32) + b,
        axis=1)
    # pure f32 reference (semantic check, looser tolerance for the bf16 fold)
    ref_f32 = jax.nn.softmax((x @ w1 + b1) @ w2 + b2, axis=1)

    assert y_pred.shape == (batch, hidden2)
    assert jnp.allclose(y_pred, ref_bf16, atol=5e-3, rtol=5e-3)
    assert jnp.allclose(y_pred, ref_f32, atol=3e-2, rtol=3e-2)
    assert jnp.allclose(jnp.sum(y_pred, axis=1), 1.0, atol=1e-5)

    # TODO(synk): the `y is not None` branch (nn.CrossEntropyLoss applied to
    # the already-softmaxed y_pred) is a training-time scalar loss; not
    # implemented as a Pallas kernel here.

    print("KERNEL_OK")
</pallas_src>

<mosaic_0001>
module attributes {stable_mosaic.version = 11 : i64} {
  func.func @mlp_softmax_kernel(%arg0: i32, %arg1: memref<8x32xf32, #tpu.memory_space<vmem>>, %arg2: memref<32x16xbf16, #tpu.memory_space<vmem>>, %arg3: memref<1x16xf32, #tpu.memory_space<vmem>>, %arg4: memref<8x16xf32, #tpu.memory_space<vmem>>) attributes {dimension_semantics = [#tpu.dimension_semantics<parallel>], iteration_bounds = array<i64: 1>, scalar_prefetch = 0 : i64, scratch_operands = 0 : i64, tpu.core_type = #tpu.core_type<tc>, window_params = [{transform_indices = @transform_0, window_bounds = array<i64: 8, 32>}, {pipeline_mode = #tpu.pipeline_mode<synchronous>, transform_indices = @transform_1, window_bounds = array<i64: 32, 16>}, {pipeline_mode = #tpu.pipeline_mode<synchronous>, transform_indices = @transform_2, window_bounds = array<i64: 1, 16>}, {transform_indices = @transform_3, window_bounds = array<i64: 8, 16>}]} {
    %c0 = arith.constant 0 : index
    %c0_0 = arith.constant 0 : index
    %0 = vector.load %arg1[%c0, %c0_0] : memref<8x32xf32, #tpu.memory_space<vmem>>, vector<8x32xf32>
    %1 = arith.truncf %0 : vector<8x32xf32> to vector<8x32xbf16>
    %c0_1 = arith.constant 0 : index
    %c0_2 = arith.constant 0 : index
    %2 = vector.load %arg2[%c0_1, %c0_2] : memref<32x16xbf16, #tpu.memory_space<vmem>>, vector<32x16xbf16>
    %cst = arith.constant dense<0.000000e+00> : vector<8x16xf32>
    %3 = tpu.matmul %1, %2, %cst {dimension_numbers = #tpu.dot_dimension_numbers<[1], [0], [0], [1], [0, 0, 1, 1], [], []>} : vector<8x32xbf16>, vector<32x16xbf16>, vector<8x16xf32> -> vector<8x16xf32>
    %c0_3 = arith.constant 0 : index
    %c0_4 = arith.constant 0 : index
    %4 = vector.load %arg3[%c0_3, %c0_4] : memref<1x16xf32, #tpu.memory_space<vmem>>, vector<1x16xf32>
    %5 = vector.broadcast %4 : vector<1x16xf32> to vector<8x16xf32>
    %6 = arith.addf %3, %5 : vector<8x16xf32>
    %cst_5 = arith.constant dense<0xFF800000> : vector<8xf32>
    %7 = vector.multi_reduction <maximumf>, %6, %cst_5 [1] : vector<8x16xf32> to vector<8xf32>
    %8 = vector.shape_cast %7 : vector<8xf32> to vector<8x1xf32>
    %9 = vector.broadcast %8 : vector<8x1xf32> to vector<8x16xf32>
    %10 = arith.subf %6, %9 : vector<8x16xf32>
    %11 = math.exp %10 : vector<8x16xf32>
    %cst_6 = arith.constant dense<0.000000e+00> : vector<8xf32>
    %12 = vector.multi_reduction <add>, %11, %cst_6 [1] : vector<8x16xf32> to vector<8xf32>
    %13 = vector.shape_cast %12 : vector<8xf32> to vector<8x1xf32>
    %14 = vector.broadcast %13 : vector<8x1xf32> to vector<8x16xf32>
    %15 = arith.divf %11, %14 : vector<8x16xf32>
    %c0_7 = arith.constant 0 : index
    %c0_8 = arith.constant 0 : index
    %16 = vector.load %arg4[%c0_7, %c0_8] : memref<8x16xf32, #tpu.memory_space<vmem>>, vector<8x16xf32>
    tpu.vector_store %arg4[%c0_7, %c0_8], %15 {strides = array<i32>} : memref<8x16xf32, #tpu.memory_space<vmem>>, vector<8x16xf32>,
    return
  }
  func.func @transform_0(%arg0: i32) -> (i32, i32) {
    %c0_i32 = arith.constant 0 : i32
    %c0_i32_0 = arith.constant 0 : i32
    return %arg0, %c0_i32 : i32, i32
  }
  func.func @transform_1(%arg0: i32) -> (i32, i32) {
    %c0_i32 = arith.constant 0 : i32
    %c0_i32_0 = arith.constant 0 : i32
    %c0_i32_1 = arith.constant 0 : i32
    return %c0_i32, %c0_i32_0 : i32, i32
  }
  func.func @transform_2(%arg0: i32) -> (i32, i32) {
    %c0_i32 = arith.constant 0 : i32
    %c0_i32_0 = arith.constant 0 : i32
    %c0_i32_1 = arith.constant 0 : i32
    return %c0_i32, %c0_i32_0 : i32, i32
  }
  func.func @transform_3(%arg0: i32) -> (i32, i32) {
    %c0_i32 = arith.constant 0 : i32
    %c0_i32_0 = arith.constant 0 : i32
    return %arg0, %c0_i32 : i32, i32
  }
}

</mosaic_0001>

<llo_original>
// kernel: torch_model_forward.1
$region0: #{torch_model_forward.1}
  #allocation0 [shape = 'u32[]', space=smem, size = 0x4, offset = 0x4, fixed_abs, tag = 'smem constant byte address 0x4 - core index']
  #allocation1 [shape = 'u32[144,128]{1,0:T(1,128)}', space=vmem, size = 0x12000, scoped, tag = 'internal scratch']
  %s0 = inlined_call_operand.vmem [shape: f32[8,32], index: 0, kind: input, shape index: {}]
  %s1 = inlined_call_operand.vmem [shape: bf16[32,16], index: 1, kind: input, shape index: {}]
  %s2 = inlined_call_operand.vmem [shape: f32[1,16], index: 2, kind: input, shape index: {}]
  %s3 = inlined_call_operand.hbm [shape: f32[8,16], index: 3, kind: output, shape index: {}]
  %s4 = sld [smem:[#allocation0]]
  $region22: #{torch_model_forward.1} parent=0
    _
  %s6 = ssub.s32 1, %s4
  %s7 = scalar_select 0, %s6, %s4
  $region1: #{torch_model_forward.1} parent=0
    #allocation2 [shape = 'u8[4096]{0}', space=vmem, size = 0x1000, scoped, tag = 'output window, operand 0, single buffered']
    #allocation3 [shape = 's32[1]{0}', space=sflag, size = 0x4, scoped, tag = 'scoped memory for torch_model_forward.1']
    %8 = vsyncpa [#allocation3], 0
    // Predicated region
    $region2: #{torch_model_forward.1} parent=1 // pred_check
      _
    $region3: #{torch_model_forward.1} parent=1 // pred_check_branch
      %10 = sbr.rel (0) target = $region5
    $region4: #{torch_model_forward.1} parent=1 // pred_region
      _
    $region5: #{torch_model_forward.1} parent=1 // pred_fallthru
      _
    // Predicated region
    $region6: #{torch_model_forward.1} parent=1 // pred_check
      _
    $region7: #{torch_model_forward.1} parent=1 // pred_check_branch
      %12 = sbr.rel (0) target = $region9
    $region8: #{torch_model_forward.1} parent=1 // pred_region
      _
    $region9: #{torch_model_forward.1} parent=1 // pred_fallthru
      _
    // Predicated region
    $region10: #{torch_model_forward.1} parent=1 // pred_check
      _
    $region11: #{torch_model_forward.1} parent=1 // pred_check_branch
      %14 = sbr.rel (0) target = $region13
    $region12: #{torch_model_forward.1} parent=1 // pred_region
      _
    $region13: #{torch_model_forward.1} parent=1 // pred_fallthru
      _
    %v16 = vld [vmem:[%s0] sm:$0xff]
    %v17 = vpack.c.bf16 %v16, %v16
    %v18 = vld [vmem:[%s1] sm:$0xf]
    %v19 = vld [vmem:[%s1 + $0x4] sm:$0xf]
    %v20 = vld [vmem:[%s1 + $0x8] sm:$0xf]
    %v21 = vld [vmem:[%s1 + $0xc] sm:$0xf]
    %v22 = vld [vmem:[%s2] sm:$0x1]
    %v24 = vlaneseq
    %v25 = vshrl.u32 %v24, 7
    %v26 = vsub.s32 0, %v25
    %v27 = vrot.slane %v22, %v26
    %v33 = vunpack.c.l.b16 %v18
    %v34 = vunpack.c.l.b16 %v19
    %v35 = vunpack.c.l.b16 %v20
    %v36 = vunpack.c.l.b16 %v21
    %v37 = vpack.c.b16 %v34, %v33
    %v38 = vpack.c.b16 %v36, %v35
    %vm41 = vcmask 261120
    %v43 = vsel %vm41, %v17, 0
    %45 = vmatprep.subr.bf16.mxu0 0
    %46 = vmatpush1.bf16.msra.mxu0 %v37
    %47 = vmatprep.subr.bf16.mxu0 0
    %48 = vmatpush1.bf16.msra.mxu0 %v38
    %49 = vmatprep.subr.bf16.mxu0 0
    %50 = vmatpush1.bf16.msra.mxu0 0
    %51 = vmatprep.subr.bf16.mxu0 0
    %52 = vmatpush1.bf16.msra.mxu0 0
    %53 = vmatprep.subr.bf16.mxu0 0
    %54 = vmatpush1.bf16.msra.mxu0 0
    %55 = vmatprep.subr.bf16.mxu0 0
    %56 = vmatpush1.bf16.msra.mxu0 0
    %57 = vmatprep.subr.bf16.mxu0 0
    %58 = vmatpush1.bf16.msra.mxu0 0
    %59 = vmatprep.subr.bf16.mxu0 0
    %60 = vmatpush1.bf16.msra.mxu0 0
    %61 = vmatprep.subr.bf16.mxu0 0
    %62 = vmatpush1.bf16.msra.mxu0 0
    %63 = vmatprep.subr.bf16.mxu0 0
    %64 = vmatpush1.bf16.msra.mxu0 0
    %65 = vmatprep.subr.bf16.mxu0 0
    %66 = vmatpush1.bf16.msra.mxu0 0
    %67 = vmatprep.subr.bf16.mxu0 0
    %68 = vmatpush1.bf16.msra.mxu0 0
    %69 = vmatprep.subr.bf16.mxu0 0
    %70 = vmatpush1.bf16.msra.mxu0 0
    %71 = vmatprep.subr.bf16.mxu0 0
    %72 = vmatpush1.bf16.msra.mxu0 0
    %73 = vmatprep.subr.bf16.mxu0 0
    %74 = vmatpush1.bf16.msra.mxu0 0
    %75 = vmatprep.subr.bf16.mxu0 0
    %76 = vmatpush1.bf16.msra.mxu0 0
    %77 = vmatprep.mubr.bf16.mxu0 0
    %78 = vmatmul.mubr.bf16.gmra.mrb[0].mxu0 %v43
    %v79 = vpop.f32.mrb[0].mxu0
    %v80 = vadd.f32 %v27, %v79
    %v81 = vpop.f32.mrb[0].mxu0
    %v82 = vpop.f32.mrb[0].mxu0
    %v83 = vpop.f32.mrb[0].mxu0
    %84 = vdwg.mxu0
    %vm85 = vcmask 130048
    %v86 = vsel %vm85, %v80, -inf
    %87 = vmax.xlane.f32.xlu0 %v86
    %v88 = vpop.xlane.xlu0 %87
    %v89 = vsub.f32 %v80, %v88
    %v90 = vmul.f32 %v89, 1.442695
    %v91 = vpow.pop %v90
    %v92 = vsel %vm85, %v91, 0.0
    %93 = vadd.xlane.f32.xlu0 %v92
    %v94 = vpop.xlane.xlu0 %93
    %v95 = vrcp.pop %v94
    %v96 = vmul.f32 %v91, %v95
    %97 = vst.msk [vmem:[#allocation2] sm:$0xff] %vm85, %v96
    // Predicated region
    $region14: #{torch_model_forward.1} parent=1 // pred_check
      _
    $region15: #{torch_model_forward.1} parent=1 // pred_check_branch
      %99 = sbr.rel (0) target = $region17
    $region16: #{torch_model_forward.1} parent=1 // pred_region
      %s101 = ssub.s32 128, 128
      %102 = vsyncadd [#allocation3], %s101
      %s104 = sshll.u32 [#allocation2], 4
      %s105 = int_to_ptr.vmem [resolvable:$true] %s104
      %107 = dma.vmem_to_hbm [thread:$0]  %s105, 128, %s3, [#allocation3]
    $region17: #{torch_model_forward.1} parent=1 // pred_fallthru
      _
    // Predicated region
    $region18: #{torch_model_forward.1} parent=1 // pred_check
      _
    $region19: #{torch_model_forward.1} parent=1 // pred_check_branch
      %109 = sbr.rel (0) target = $region21
    $region20: #{torch_model_forward.1} parent=1 // pred_region
      %110 = dma.done [#allocation3], 128
    $region21: #{torch_model_forward.1} parent=1 // pred_fallthru
      _
    %111 = vsyncpa [#allocation3], 1

</llo_original>
